<compile_context>
chip_gen: v7x
topology: tpu7x:2x2x1
jax: 0.10.0
libtpu: 0.0.40
codegen_flags: <defaults>
</compile_context>

<pallas_src>
import functools

import jax
import jax.numpy as jnp
from jax.experimental import pallas as pl
from jax.experimental.pallas import tpu as pltpu

HIDDEN = 128
OUT_PAD = 128  # lane-dense (padded) output width


def _round_up(n, m):
    return (n + m - 1) // m * m


def _supports_bf16_vpu():
    """True on chips with bf16 VPU/EUP (v6e/v7x); False on v5-class/older."""
    try:
        kind = jax.devices()[0].device_kind.lower()
    except Exception:
        return False
    return not any(tag in kind for tag in ("v2", "v3", "v4", "v5"))


def _actor_kernel(x_ref, w1_ref, w2_ref, w3_ref, wo_ref, b_ref, bo_ref,
                  out_ref, *, max_action, bf16_act):
    # x_ref:  (TB, in_dim) batch tile (f32 or bf16)
    # w*_ref: bf16 weights, pre-transposed to (in, out); wo padded to OUT_PAD
    # b_ref:  (3, HIDDEN) f32 packed hidden biases
    # bo_ref: (1, OUT_PAD) f32 padded output bias
    act_dt = jnp.bfloat16 if bf16_act else jnp.float32

    x = x_ref[...].astype(jnp.bfloat16)  # no-op if caller already passes bf16

    h = jnp.dot(x, w1_ref[...], preferred_element_type=jnp.float32)
    h = jnp.maximum(h + b_ref[0:1, :], 0.0).astype(act_dt)

    h = jnp.dot(h.astype(jnp.bfloat16), w2_ref[...],
                preferred_element_type=jnp.float32)
    h = jnp.maximum(h + b_ref[1:2, :], 0.0).astype(act_dt)

    h = jnp.dot(h.astype(jnp.bfloat16), w3_ref[...],
                preferred_element_type=jnp.float32)
    h = jnp.maximum(h + b_ref[2:3, :], 0.0).astype(act_dt)

    a = jnp.dot(h.astype(jnp.bfloat16), wo_ref[...],
                preferred_element_type=jnp.float32) + bo_ref[...]
    # Padded lanes have zero weights/bias -> tanh(0)=0; sliced off by wrapper.
    out_ref[...] = (max_action * jnp.tanh(a)).astype(out_ref.dtype)


def prepare_params(params):
    """One-time conversion of torch-style params into kernel-ready arrays.

    Transposes (out, in) -> (in, out), casts weights to bf16, packs the three
    hidden biases into one (3, 128) operand, and zero-pads the action head to
    OUT_PAD lanes so the output tile is lane-dense.
    """
    act_dim = int(params["wo"].shape[0])
    wo = params["wo"].T.astype(jnp.bfloat16)                  # (128, act)
    wo = jnp.pad(wo, ((0, 0), (0, OUT_PAD - act_dim)))        # (128, OUT_PAD)
    bo = params["bo"].reshape(1, -1).astype(jnp.float32)
    bo = jnp.pad(bo, ((0, 0), (0, OUT_PAD - act_dim)))        # (1, OUT_PAD)
    return dict(
        w1=params["w1"].T.astype(jnp.bfloat16),               # (in_dim, 128)
        w2=params["w2"].T.astype(jnp.bfloat16),               # (128, 128)
        w3=params["w3"].T.astype(jnp.bfloat16),               # (128, 128)
        wo=wo,
        b123=jnp.stack([params["b1"], params["b2"], params["b3"]],
                       axis=0).astype(jnp.float32),           # (3, 128)
        bo=bo,
        act_dim=act_dim,
    )


def actor_forward(x, kparams, max_action, *, tile_b=2048, bf16_act=None):
    """x: (B, obs+goal) f32 or bf16 -> actions (B, act_dim) f32."""
    B, in_dim = x.shape
    act_dim = kparams["act_dim"]
    if bf16_act is None:
        bf16_act = _supports_bf16_vpu()

    # Batch tile: big tiles amortize per-step overhead; never exceed the batch,
    # and (when the batch allows) keep >= 2 grid steps so both v7x TCs run.
    tb = min(tile_b, _round_up(B, 8), max(8, _round_up(pl.cdiv(B, 2), 8)))
    Bp = _round_up(B, tb)
    if Bp != B:
        x = jnp.pad(x, ((0, Bp - B), (0, 0)))  # pad rows, sliced off below

    kernel = functools.partial(_actor_kernel, max_action=float(max_action),
                               bf16_act=bool(bf16_act))

    weight_bytes = (kparams["w1"].size + kparams["w2"].size +
                    kparams["w3"].size + kparams["wo"].size) * 2 + \
                   (kparams["b123"].size + kparams["bo"].size) * 4
    cost = pl.CostEstimate(
        flops=2 * Bp * HIDDEN * (in_dim + 2 * HIDDEN + OUT_PAD),
        transcendentals=Bp * OUT_PAD,
        bytes_accessed=Bp * in_dim * x.dtype.itemsize
                       + Bp * OUT_PAD * 4 + weight_bytes,
    )

    out = pl.pallas_call(
        kernel,
        out_shape=jax.ShapeDtypeStruct((Bp, OUT_PAD), jnp.float32),
        grid=(Bp // tb,),
        in_specs=[
            pl.BlockSpec((tb, in_dim), lambda i: (i, 0)),        # x (tiled)
            pl.BlockSpec((in_dim, HIDDEN), lambda i: (0, 0)),    # w1 resident
            pl.BlockSpec((HIDDEN, HIDDEN), lambda i: (0, 0)),    # w2 resident
            pl.BlockSpec((HIDDEN, HIDDEN), lambda i: (0, 0)),    # w3 resident
            pl.BlockSpec((HIDDEN, OUT_PAD), lambda i: (0, 0)),   # wo resident
            pl.BlockSpec((3, HIDDEN), lambda i: (0, 0)),         # packed biases
            pl.BlockSpec((1, OUT_PAD), lambda i: (0, 0)),        # output bias
        ],
        out_specs=pl.BlockSpec((tb, OUT_PAD), lambda i: (i, 0)),
        compiler_params=pltpu.CompilerParams(
            dimension_semantics=("parallel",)),
        cost_estimate=cost,
    )(x, kparams["w1"], kparams["w2"], kparams["w3"], kparams["wo"],
      kparams["b123"], kparams["bo"])

    return out[:B, :act_dim]


def init_params(key, in_dim, act_dim, hidden=HIDDEN):
    """Deterministic synthetic init, torch nn.Linear weight shapes (out, in)."""
    ks = jax.random.split(key, 8)

    def lin(kw, kb, out_d, in_d):
        bound = 1.0 / jnp.sqrt(in_d)
        w = jax.random.uniform(kw, (out_d, in_d), jnp.float32, -bound, bound)
        b = jax.random.uniform(kb, (out_d,), jnp.float32, -bound, bound)
        return w, b

    w1, b1 = lin(ks[0], ks[1], hidden, in_dim)
    w2, b2 = lin(ks[2], ks[3], hidden, hidden)
    w3, b3 = lin(ks[4], ks[5], hidden, hidden)
    wo, bo = lin(ks[6], ks[7], act_dim, hidden)
    return dict(w1=w1, b1=b1, w2=w2, b2=b2, w3=w3, b3=b3, wo=wo, bo=bo)


def actor_reference(x, params, max_action):
    """Pure-JAX f32 reference of the PyTorch forward."""
    h = jax.nn.relu(x @ params["w1"].T + params["b1"])
    h = jax.nn.relu(h @ params["w2"].T + params["b2"])
    h = jax.nn.relu(h @ params["w3"].T + params["b3"])
    return max_action * jnp.tanh(h @ params["wo"].T + params["bo"])


if __name__ == "__main__":
    # env_params analogue: obs=10, goal=3, action=4, action_max=2.0
    OBS, GOAL, ACT = 10, 3, 4
    MAX_ACTION = 2.0
    BATCH = 8
    IN_DIM = OBS + GOAL

    key = jax.random.PRNGKey(0)
    k_par, k_x = jax.random.split(key, 2)

    params = init_params(k_par, IN_DIM, ACT)
    kparams = prepare_params(params)        # one-time, outside the hot path
    x = jax.random.normal(k_x, (BATCH, IN_DIM), jnp.float32)

    actions = actor_forward(x, kparams, MAX_ACTION)
    actions = jax.block_until_ready(actions)

    actions_ref = actor_reference(x, params, MAX_ACTION)
    assert actions.shape == (BATCH, ACT)
    # bf16 matmul operands (f32 accumulation) -> slightly looser tolerance.
    assert jnp.allclose(actions, actions_ref, atol=2e-2, rtol=2e-2)
    assert jnp.all(jnp.abs(actions) <= MAX_ACTION + 1e-6)

    # Also exercise a larger batch (multi-step grid, padded tail, bf16 input).
    xb = jax.random.normal(jax.random.PRNGKey(1), (1000, IN_DIM), jnp.float32)
    act_big = jax.block_until_ready(
        actor_forward(xb.astype(jnp.bfloat16), kparams, MAX_ACTION))
    ref_big = actor_reference(xb, params, MAX_ACTION)
    assert act_big.shape == (1000, ACT)
    assert jnp.allclose(act_big, ref_big, atol=3e-2, rtol=3e-2)

    print("KERNEL_OK")
</pallas_src>

<mosaic_0001>
module attributes {stable_mosaic.version = 11 : i64} {
  func.func @_actor_kernel(%arg0: i32, %arg1: memref<8x13xf32, #tpu.memory_space<vmem>>, %arg2: memref<13x128xbf16, #tpu.memory_space<vmem>>, %arg3: memref<128x128xbf16, #tpu.memory_space<vmem>>, %arg4: memref<128x128xbf16, #tpu.memory_space<vmem>>, %arg5: memref<128x128xbf16, #tpu.memory_space<vmem>>, %arg6: memref<3x128xf32, #tpu.memory_space<vmem>>, %arg7: memref<1x128xf32, #tpu.memory_space<vmem>>, %arg8: memref<8x128xf32, #tpu.memory_space<vmem>>) attributes {dimension_semantics = [#tpu.dimension_semantics<parallel>], iteration_bounds = array<i64: 1>, scalar_prefetch = 0 : i64, scratch_operands = 0 : i64, tpu.core_type = #tpu.core_type<tc>, window_params = [{transform_indices = @transform_0, window_bounds = array<i64: 8, 13>}, {pipeline_mode = #tpu.pipeline_mode<synchronous>, transform_indices = @transform_1, window_bounds = array<i64: 13, 128>}, {pipeline_mode = #tpu.pipeline_mode<synchronous>, transform_indices = @transform_2, window_bounds = array<i64: 128, 128>}, {pipeline_mode = #tpu.pipeline_mode<synchronous>, transform_indices = @transform_3, window_bounds = array<i64: 128, 128>}, {pipeline_mode = #tpu.pipeline_mode<synchronous>, transform_indices = @transform_4, window_bounds = array<i64: 128, 128>}, {pipeline_mode = #tpu.pipeline_mode<synchronous>, transform_indices = @transform_5, window_bounds = array<i64: 3, 128>}, {pipeline_mode = #tpu.pipeline_mode<synchronous>, transform_indices = @transform_6, window_bounds = array<i64: 1, 128>}, {transform_indices = @transform_7, window_bounds = array<i64: 8, 128>}]} {
    %c0 = arith.constant 0 : index
    %c0_0 = arith.constant 0 : index
    %0 = vector.load %arg1[%c0, %c0_0] : memref<8x13xf32, #tpu.memory_space<vmem>>, vector<8x13xf32>
    %1 = arith.truncf %0 : vector<8x13xf32> to vector<8x13xbf16>
    %c0_1 = arith.constant 0 : index
    %c0_2 = arith.constant 0 : index
    %2 = vector.load %arg2[%c0_1, %c0_2] : memref<13x128xbf16, #tpu.memory_space<vmem>>, vector<13x128xbf16>
    %cst = arith.constant dense<0.000000e+00> : vector<8x128xf32>
    %3 = tpu.matmul %1, %2, %cst {dimension_numbers = #tpu.dot_dimension_numbers<[1], [0], [0], [1], [0, 0, 1, 1], [], []>} : vector<8x13xbf16>, vector<13x128xbf16>, vector<8x128xf32> -> vector<8x128xf32>
    %c0_3 = arith.constant 0 : index
    %c0_4 = arith.constant 0 : index
    %4 = vector.load %arg6[%c0_3, %c0_4] : memref<3x128xf32, #tpu.memory_space<vmem>>, vector<1x128xf32>
    %5 = vector.broadcast %4 : vector<1x128xf32> to vector<8x128xf32>
    %6 = arith.addf %3, %5 : vector<8x128xf32>
    %cst_5 = arith.constant 0.000000e+00 : f32
    %7 = vector.broadcast %cst_5 : f32 to vector<8x128xf32>
    %8 = arith.maximumf %6, %7 : vector<8x128xf32>
    %9 = arith.truncf %8 : vector<8x128xf32> to vector<8x128xbf16>
    %c0_6 = arith.constant 0 : index
    %c0_7 = arith.constant 0 : index
    %10 = vector.load %arg3[%c0_6, %c0_7] : memref<128x128xbf16, #tpu.memory_space<vmem>>, vector<128x128xbf16>
    %cst_8 = arith.constant dense<0.000000e+00> : vector<8x128xf32>
    %11 = tpu.matmul %9, %10, %cst_8 {dimension_numbers = #tpu.dot_dimension_numbers<[1], [0], [0], [1], [0, 0, 1, 1], [], []>} : vector<8x128xbf16>, vector<128x128xbf16>, vector<8x128xf32> -> vector<8x128xf32>
    %c1 = arith.constant 1 : index
    %c0_9 = arith.constant 0 : index
    %12 = vector.load %arg6[%c1, %c0_9] : memref<3x128xf32, #tpu.memory_space<vmem>>, vector<1x128xf32>
    %13 = vector.broadcast %12 : vector<1x128xf32> to vector<8x128xf32>
    %14 = arith.addf %11, %13 : vector<8x128xf32>
    %cst_10 = arith.constant 0.000000e+00 : f32
    %15 = vector.broadcast %cst_10 : f32 to vector<8x128xf32>
    %16 = arith.maximumf %14, %15 : vector<8x128xf32>
    %17 = arith.truncf %16 : vector<8x128xf32> to vector<8x128xbf16>
    %c0_11 = arith.constant 0 : index
    %c0_12 = arith.constant 0 : index
    %18 = vector.load %arg4[%c0_11, %c0_12] : memref<128x128xbf16, #tpu.memory_space<vmem>>, vector<128x128xbf16>
    %cst_13 = arith.constant dense<0.000000e+00> : vector<8x128xf32>
    %19 = tpu.matmul %17, %18, %cst_13 {dimension_numbers = #tpu.dot_dimension_numbers<[1], [0], [0], [1], [0, 0, 1, 1], [], []>} : vector<8x128xbf16>, vector<128x128xbf16>, vector<8x128xf32> -> vector<8x128xf32>
    %c2 = arith.constant 2 : index
    %c0_14 = arith.constant 0 : index
    %20 = vector.load %arg6[%c2, %c0_14] : memref<3x128xf32, #tpu.memory_space<vmem>>, vector<1x128xf32>
    %21 = vector.broadcast %20 : vector<1x128xf32> to vector<8x128xf32>
    %22 = arith.addf %19, %21 : vector<8x128xf32>
    %cst_15 = arith.constant 0.000000e+00 : f32
    %23 = vector.broadcast %cst_15 : f32 to vector<8x128xf32>
    %24 = arith.maximumf %22, %23 : vector<8x128xf32>
    %25 = arith.truncf %24 : vector<8x128xf32> to vector<8x128xbf16>
    %c0_16 = arith.constant 0 : index
    %c0_17 = arith.constant 0 : index
    %26 = vector.load %arg5[%c0_16, %c0_17] : memref<128x128xbf16, #tpu.memory_space<vmem>>, vector<128x128xbf16>
    %cst_18 = arith.constant dense<0.000000e+00> : vector<8x128xf32>
    %27 = tpu.matmul %25, %26, %cst_18 {dimension_numbers = #tpu.dot_dimension_numbers<[1], [0], [0], [1], [0, 0, 1, 1], [], []>} : vector<8x128xbf16>, vector<128x128xbf16>, vector<8x128xf32> -> vector<8x128xf32>
    %c0_19 = arith.constant 0 : index
    %c0_20 = arith.constant 0 : index
    %28 = vector.load %arg7[%c0_19, %c0_20] : memref<1x128xf32, #tpu.memory_space<vmem>>, vector<1x128xf32>
    %29 = vector.broadcast %28 : vector<1x128xf32> to vector<8x128xf32>
    %30 = arith.addf %27, %29 : vector<8x128xf32>
    %31 = math.tanh %30 : vector<8x128xf32>
    %cst_21 = arith.constant 2.000000e+00 : f32
    %32 = vector.broadcast %cst_21 : f32 to vector<8x128xf32>
    %33 = arith.mulf %32, %31 : vector<8x128xf32>
    %c0_22 = arith.constant 0 : index
    %c0_23 = arith.constant 0 : index
    %34 = vector.load %arg8[%c0_22, %c0_23] : memref<8x128xf32, #tpu.memory_space<vmem>>, vector<8x128xf32>
    tpu.vector_store %arg8[%c0_22, %c0_23], %33 {strides = array<i32>} : memref<8x128xf32, #tpu.memory_space<vmem>>, vector<8x128xf32>,
    return
  }
  func.func @transform_0(%arg0: i32) -> (i32, i32) {
    %c0_i32 = arith.constant 0 : i32
    %c0_i32_0 = arith.constant 0 : i32
    return %arg0, %c0_i32 : i32, i32
  }
  func.func @transform_1(%arg0: i32) -> (i32, i32) {
    %c0_i32 = arith.constant 0 : i32
    %c0_i32_0 = arith.constant 0 : i32
    %c0_i32_1 = arith.constant 0 : i32
    return %c0_i32, %c0_i32_0 : i32, i32
  }
  func.func @transform_2(%arg0: i32) -> (i32, i32) {
    %c0_i32 = arith.constant 0 : i32
    %c0_i32_0 = arith.constant 0 : i32
    %c0_i32_1 = arith.constant 0 : i32
    return %c0_i32, %c0_i32_0 : i32, i32
  }
  func.func @transform_3(%arg0: i32) -> (i32, i32) {
    %c0_i32 = arith.constant 0 : i32
    %c0_i32_0 = arith.constant 0 : i32
    %c0_i32_1 = arith.constant 0 : i32
    return %c0_i32, %c0_i32_0 : i32, i32
  }
  func.func @transform_4(%arg0: i32) -> (i32, i32) {
    %c0_i32 = arith.constant 0 : i32
    %c0_i32_0 = arith.constant 0 : i32
    %c0_i32_1 = arith.constant 0 : i32
    return %c0_i32, %c0_i32_0 : i32, i32
  }
  func.func @transform_5(%arg0: i32) -> (i32, i32) {
    %c0_i32 = arith.constant 0 : i32
    %c0_i32_0 = arith.constant 0 : i32
    %c0_i32_1 = arith.constant 0 : i32
    return %c0_i32, %c0_i32_0 : i32, i32
  }
  func.func @transform_6(%arg0: i32) -> (i32, i32) {
    %c0_i32 = arith.constant 0 : i32
    %c0_i32_0 = arith.constant 0 : i32
    %c0_i32_1 = arith.constant 0 : i32
    return %c0_i32, %c0_i32_0 : i32, i32
  }
  func.func @transform_7(%arg0: i32) -> (i32, i32) {
    %c0_i32 = arith.constant 0 : i32
    %c0_i32_0 = arith.constant 0 : i32
    return %arg0, %c0_i32 : i32, i32
  }
}

</mosaic_0001>

<llo_original>
// kernel: tpu_custom_call.1
$region0: #{tpu_custom_call.1}
  #allocation0 [shape = 'u32[]', space=smem, size = 0x4, offset = 0x4, fixed_abs, tag = 'smem constant byte address 0x4 - core index']
  #allocation1 [shape = 'u32[144,128]{1,0:T(1,128)}', space=vmem, size = 0x12000, scoped, tag = 'internal scratch']
  %s0 = inlined_call_operand.hbm [shape: f32[8,13], index: 0, kind: input, shape index: {}]
  %s1 = inlined_call_operand.hbm [shape: bf16[13,128], index: 1, kind: input, shape index: {}]
  %s2 = inlined_call_operand.hbm [shape: bf16[128,128], index: 2, kind: input, shape index: {}]
  %s3 = inlined_call_operand.hbm [shape: bf16[128,128], index: 3, kind: input, shape index: {}]
  %s4 = inlined_call_operand.hbm [shape: bf16[128,128], index: 4, kind: input, shape index: {}]
  %s5 = inlined_call_operand.vmem [shape: f32[3,128], index: 5, kind: input, shape index: {}]
  %s6 = inlined_call_operand.vmem [shape: f32[1,128], index: 6, kind: input, shape index: {}]
  %s7 = inlined_call_operand.hbm [shape: f32[8,128], index: 7, kind: output, shape index: {}]
  %s8 = sld [smem:[#allocation0]]
  $region58: #{tpu_custom_call.1} parent=0
    _
  %s10 = ssub.s32 1, %s8
  %s11 = scalar_select 0, %s10, %s8
  $region1: #{tpu_custom_call.1} parent=0
    #allocation2 [shape = 'u8[4096]{0}', space=vmem, size = 0x1000, scoped, tag = 'input window, operand 0, single buffered']
    #allocation3 [shape = 's32[1]{0}', space=sflag, size = 0x4, scoped, tag = 'scoped memory for tpu_custom_call.1']
    #allocation4 [shape = 's32[1]{0}', space=sflag, size = 0x4, scoped, tag = 'scoped memory for tpu_custom_call.1']
    #allocation5 [shape = 'u8[4096]{0}', space=vmem, size = 0x1000, scoped, tag = 'input window, operand 1, single buffered']
    #allocation6 [shape = 's32[1]{0}', space=sflag, size = 0x4, scoped, tag = 'scoped memory for tpu_custom_call.1']
    #allocation7 [shape = 'u8[32768]{0}', space=vmem, size = 0x8000, scoped, tag = 'input window, operand 2, single buffered']
    #allocation8 [shape = 'u8[32768]{0}', space=vmem, size = 0x8000, scoped, tag = 'input window, operand 3, single buffered']
    #allocation9 [shape = 's32[1]{0}', space=sflag, size = 0x4, scoped, tag = 'scoped memory for tpu_custom_call.1']
    #allocation10 [shape = 'u8[32768]{0}', space=vmem, size = 0x8000, scoped, tag = 'input window, operand 4, single buffered']
    #allocation11 [shape = 'u8[4096]{0}', space=vmem, size = 0x1000, scoped, tag = 'output window, operand 0, single buffered']
    %12 = vsyncpa [#allocation3], 0
    %13 = vsyncpa [#allocation6], 0
    %14 = vsyncpa [#allocation9], 0
    %15 = vsyncpa [#allocation4], 0
    // Predicated region
    $region2: #{tpu_custom_call.1} parent=1 // pred_check
      _
    $region3: #{tpu_custom_call.1} parent=1 // pred_check_branch
      %17 = sbr.rel (0) target = $region5
    $region4: #{tpu_custom_call.1} parent=1 // pred_region
      %s19 = ssub.s32 128, 128
      %20 = vsyncadd [#allocation3], %s19
      %s22 = sshll.u32 [#allocation2], 4
      %s23 = int_to_ptr.vmem [resolvable:$true] %s22
      %25 = dma.hbm_to_vmem [thread:$0]  %s0, 128, %s23, [#allocation3]
    $region5: #{tpu_custom_call.1} parent=1 // pred_fallthru
      _
    // Predicated region
    $region6: #{tpu_custom_call.1} parent=1 // pred_check
      _
    $region7: #{tpu_custom_call.1} parent=1 // pred_check_branch
      %27 = sbr.rel (0) target = $region9
    $region8: #{tpu_custom_call.1} parent=1 // pred_region
      %s29 = ssub.s32 128, 128
      %30 = vsyncadd [#allocation6], %s29
      %s31 = sshll.u32 [#allocation5], 4
      %s32 = int_to_ptr.vmem [resolvable:$true] %s31
      %37 = dma.hbm_to_vmem [thread:$0]  %s1, 128, %s32, [#allocation6], 64, 64, 4
    $region9: #{tpu_custom_call.1} parent=1 // pred_fallthru
      _
    // Predicated region
    $region10: #{tpu_custom_call.1} parent=1 // pred_check
      _
    $region11: #{tpu_custom_call.1} parent=1 // pred_check_branch
      %39 = sbr.rel (0) target = $region13
    $region12: #{tpu_custom_call.1} parent=1 // pred_region
      %s41 = ssub.s32 1024, 1024
      %42 = vsyncadd [#allocation6], %s41
      %s43 = sshll.u32 [#allocation7], 4
      %s44 = int_to_ptr.vmem [resolvable:$true] %s43
      %49 = dma.hbm_to_vmem [thread:$0]  %s2, 1024, %s44, [#allocation6], 64, 64, 4
    $region13: #{tpu_custom_call.1} parent=1 // pred_fallthru
      _
    // Predicated region
    $region14: #{tpu_custom_call.1} parent=1 // pred_check
      _
    $region15: #{tpu_custom_call.1} parent=1 // pred_check_branch
      %51 = sbr.rel (0) target = $region17
    $region16: #{tpu_custom_call.1} parent=1 // pred_region
      %s53 = ssub.s32 1024, 1024
      %54 = vsyncadd [#allocation9], %s53
      %s55 = sshll.u32 [#allocation8], 4
      %s56 = int_to_ptr.vmem [resolvable:$true] %s55
      %61 = dma.hbm_to_vmem [thread:$0]  %s3, 1024, %s56, [#allocation9], 64, 64, 4
    $region17: #{tpu_custom_call.1} parent=1 // pred_fallthru
      _
    // Predicated region
    $region18: #{tpu_custom_call.1} parent=1 // pred_check
      _
    $region19: #{tpu_custom_call.1} parent=1 // pred_check_branch
      %63 = sbr.rel (0) target = $region21
    $region20: #{tpu_custom_call.1} parent=1 // pred_region
      %s65 = ssub.s32 1024, 1024
      %66 = vsyncadd [#allocation9], %s65
      %s67 = sshll.u32 [#allocation10], 4
      %s68 = int_to_ptr.vmem [resolvable:$true] %s67
      %73 = dma.hbm_to_vmem [thread:$0]  %s4, 1024, %s68, [#allocation9], 64, 64, 4
    $region21: #{tpu_custom_call.1} parent=1 // pred_fallthru
      _
    // Predicated region
    $region22: #{tpu_custom_call.1} parent=1 // pred_check
      _
    $region23: #{tpu_custom_call.1} parent=1 // pred_check_branch
      %75 = sbr.rel (0) target = $region25
    $region24: #{tpu_custom_call.1} parent=1 // pred_region
      _
    $region25: #{tpu_custom_call.1} parent=1 // pred_fallthru
      _
    // Predicated region
    $region26: #{tpu_custom_call.1} parent=1 // pred_check
      _
    $region27: #{tpu_custom_call.1} parent=1 // pred_check_branch
      %77 = sbr.rel (0) target = $region29
    $region28: #{tpu_custom_call.1} parent=1 // pred_region
      _
    $region29: #{tpu_custom_call.1} parent=1 // pred_fallthru
      _
    // Predicated region
    $region30: #{tpu_custom_call.1} parent=1 // pred_check
      _
    $region31: #{tpu_custom_call.1} parent=1 // pred_check_branch
      %79 = sbr.rel (0) target = $region33
    $region32: #{tpu_custom_call.1} parent=1 // pred_region
      %80 = dma.done [#allocation3], 128
    $region33: #{tpu_custom_call.1} parent=1 // pred_fallthru
      _
    // Predicated region
    $region34: #{tpu_custom_call.1} parent=1 // pred_check
      _
    $region35: #{tpu_custom_call.1} parent=1 // pred_check_branch
      %82 = sbr.rel (0) target = $region37
    $region36: #{tpu_custom_call.1} parent=1 // pred_region
      %83 = dma.done [#allocation6], 128
    $region37: #{tpu_custom_call.1} parent=1 // pred_fallthru
      _
    // Predicated region
    $region38: #{tpu_custom_call.1} parent=1 // pred_check
      _
    $region39: #{tpu_custom_call.1} parent=1 // pred_check_branch
      %85 = sbr.rel (0) target = $region41
    $region40: #{tpu_custom_call.1} parent=1 // pred_region
      %86 = dma.done [#allocation6], 1024
    $region41: #{tpu_custom_call.1} parent=1 // pred_fallthru
      _
    // Predicated region
    $region42: #{tpu_custom_call.1} parent=1 // pred_check
      _
    $region43: #{tpu_custom_call.1} parent=1 // pred_check_branch
      %88 = sbr.rel (0) target = $region45
    $region44: #{tpu_custom_call.1} parent=1 // pred_region
      %89 = dma.done [#allocation9], 1024
    $region45: #{tpu_custom_call.1} parent=1 // pred_fallthru
      _
    // Predicated region
    $region46: #{tpu_custom_call.1} parent=1 // pred_check
      _
    $region47: #{tpu_custom_call.1} parent=1 // pred_check_branch
      %91 = sbr.rel (0) target = $region49
    $region48: #{tpu_custom_call.1} parent=1 // pred_region
      %92 = dma.done [#allocation9], 1024
    $region49: #{tpu_custom_call.1} parent=1 // pred_fallthru
      _
    %v94 = vld [vmem:[#allocation2] sm:$0xff]
    %v95 = vpack.c.bf16 %v94, %v94
    %v96 = vld [vmem:[#allocation5] sm:$0xf]
    %v97 = vld [vmem:[#allocation5 + $0x4] sm:$0x7]
    %v98 = vld [vmem:[%s5] sm:$0x1]
    %v99 = vlaneseq
    %v100 = vshrl.u32 %v99, 7
    %v101 = vsub.s32 0, %v100
    %v102 = vrot.slane %v98, %v101
    %v105 = vunpack.c.l.b16 %v96
    %v106 = vunpack.c.l.b16 %v97
    %v107 = vpack.c.b16 %v106, %v105
    %vm108 = vcmask 105472
    %v110 = vsel %vm108, %v95, 0
    %vm112 = vcmask 1045504
    %vm113 = vcmask 1046528
    %v114 = vsel %vm112, 4294967295, 65535
    %v115 = vsel %vm113, %v114, 0
    %v117 = vand.u32 %v107, %v115
    %119 = vmatprep.subr.bf16.mxu0 0
    %120 = vmatpush1.bf16.msra.mxu0 %v117
    %121 = vmatprep.subr.bf16.mxu0 0
    %122 = vmatpush1.bf16.msra.mxu0 0
    %123 = vmatprep.subr.bf16.mxu0 0
    %124 = vmatpush1.bf16.msra.mxu0 0
    %125 = vmatprep.subr.bf16.mxu0 0
    %126 = vmatpush1.bf16.msra.mxu0 0
    %127 = vmatprep.subr.bf16.mxu0 0
    %128 = vmatpush1.bf16.msra.mxu0 0
    %129 = vmatprep.subr.bf16.mxu0 0
    %130 = vmatpush1.bf16.msra.mxu0 0
    %131 = vmatprep.subr.bf16.mxu0 0
    %132 = vmatpush1.bf16.msra.mxu0 0
    %133 = vmatprep.subr.bf16.mxu0 0
    %134 = vmatpush1.bf16.msra.mxu0 0
    %135 = vmatprep.subr.bf16.mxu0 0
    %136 = vmatpush1.bf16.msra.mxu0 0
    %137 = vmatprep.subr.bf16.mxu0 0
    %138 = vmatpush1.bf16.msra.mxu0 0
    %139 = vmatprep.subr.bf16.mxu0 0
    %140 = vmatpush1.bf16.msra.mxu0 0
    %141 = vmatprep.subr.bf16.mxu0 0
    %142 = vmatpush1.bf16.msra.mxu0 0
    %143 = vmatprep.subr.bf16.mxu0 0
    %144 = vmatpush1.bf16.msra.mxu0 0
    %145 = vmatprep.subr.bf16.mxu0 0
    %146 = vmatpush1.bf16.msra.mxu0 0
    %147 = vmatprep.subr.bf16.mxu0 0
    %148 = vmatpush1.bf16.msra.mxu0 0
    %149 = vmatprep.subr.bf16.mxu0 0
    %150 = vmatpush1.bf16.msra.mxu0 0
    %151 = vmatprep.mubr.bf16.mxu0 0
    %152 = vmatmul.mubr.bf16.gmra.mrb[0].mxu0 %v110
    %v153 = vpop.f32.mrb[0].mxu0
    %v154 = vadd.f32 %v102, %v153
    %v155 = vpop.f32.mrb[0].mxu0
    %v156 = vpop.f32.mrb[0].mxu0
    %v157 = vpop.f32.mrb[0].mxu0
    %158 = vdwg.mxu0
    %v159 = vmax.f32 %v154, 0.0
    %v160 = vpack.c.bf16 %v159, %v159
    %v161 = vld [vmem:[#allocation7] sm:$0xf]
    %v162 = vld [vmem:[#allocation7 + $0x4] sm:$0xf]
    %v163 = vld [vmem:[#allocation7 + $0x8] sm:$0xf]
    %v164 = vld [vmem:[#allocation7 + $0xc] sm:$0xf]
    %v165 = vld [vmem:[#allocation7 + $0x10] sm:$0xf]
    %v166 = vld [vmem:[#allocation7 + $0x14] sm:$0xf]
    %v167 = vld [vmem:[#allocation7 + $0x18] sm:$0xf]
    %v168 = vld [vmem:[#allocation7 + $0x1c] sm:$0xf]
    %v169 = vld [vmem:[#allocation7 + $0x20] sm:$0xf]
    %v170 = vld [vmem:[#allocation7 + $0x24] sm:$0xf]
    %v171 = vld [vmem:[#allocation7 + $0x28] sm:$0xf]
    %v172 = vld [vmem:[#allocation7 + $0x2c] sm:$0xf]
    %v173 = vld [vmem:[#allocation7 + $0x30] sm:$0xf]
    %v174 = vld [vmem:[#allocation7 + $0x34] sm:$0xf]
    %v175 = vld [vmem:[#allocation7 + $0x38] sm:$0xf]
    %v176 = vld [vmem:[#allocation7 + $0x3c] sm:$0xf]
    %v177 = vld [vmem:[%s5 + $0x1] sm:$0x1]
    %v178 = vlaneseq
    %v179 = vshrl.u32 %v178, 7
    %v180 = vsub.s32 0, %v179
    %v181 = vrot.slane %v177, %v180
    %v198 = vunpack.c.l.b16 %v161
    %v199 = vunpack.c.l.b16 %v162
    %v200 = vunpack.c.l.b16 %v163
    %v201 = vunpack.c.l.b16 %v164
    %v202 = vunpack.c.l.b16 %v165
    %v203 = vunpack.c.l.b16 %v166
    %v204 = vunpack.c.l.b16 %v167
    %v205 = vunpack.c.l.b16 %v168
    %v206 = vunpack.c.l.b16 %v169
    %v207 = vunpack.c.l.b16 %v170
    %v208 = vunpack.c.l.b16 %v171
    %v209 = vunpack.c.l.b16 %v172
    %v210 = vunpack.c.l.b16 %v173
    %v211 = vunpack.c.l.b16 %v174
    %v212 = vunpack.c.l.b16 %v175
    %v213 = vunpack.c.l.b16 %v176
    %v214 = vpack.c.b16 %v199, %v198
    %v215 = vpack.c.b16 %v201, %v200
    %v216 = vpack.c.b16 %v203, %v202
    %v217 = vpack.c.b16 %v205, %v204
    %v218 = vpack.c.b16 %v207, %v206
    %v219 = vpack.c.b16 %v209, %v208
    %v220 = vpack.c.b16 %v211, %v210
    %v221 = vpack.c.b16 %v213, %v212
    %230 = vmatprep.subr.bf16.mxu0 0
    %231 = vmatpush1.bf16.msra.mxu0 %v214
    %232 = vmatprep.subr.bf16.mxu0 0
    %233 = vmatpush1.bf16.msra.mxu0 %v215
    %234 = vmatprep.subr.bf16.mxu0 0
    %235 = vmatpush1.bf16.msra.mxu0 %v216
    %236 = vmatprep.subr.bf16.mxu0 0
    %237 = vmatpush1.bf16.msra.mxu0 %v217
    %238 = vmatprep.subr.bf16.mxu0 0
    %239 = vmatpush1.bf16.msra.mxu0 %v218
    %240 = vmatprep.subr.bf16.mxu0 0
    %241 = vmatpush1.bf16.msra.mxu0 %v219
    %242 = vmatprep.subr.bf16.mxu0 0
    %243 = vmatpush1.bf16.msra.mxu0 %v220
    %244 = vmatprep.subr.bf16.mxu0 0
    %245 = vmatpush1.bf16.msra.mxu0 %v221
    %246 = vmatprep.subr.bf16.mxu0 0
    %247 = vmatpush1.bf16.msra.mxu0 0
    %248 = vmatprep.subr.bf16.mxu0 0
    %249 = vmatpush1.bf16.msra.mxu0 0
    %250 = vmatprep.subr.bf16.mxu0 0
    %251 = vmatpush1.bf16.msra.mxu0 0
    %252 = vmatprep.subr.bf16.mxu0 0
    %253 = vmatpush1.bf16.msra.mxu0 0
    %254 = vmatprep.subr.bf16.mxu0 0
    %255 = vmatpush1.bf16.msra.mxu0 0
    %256 = vmatprep.subr.bf16.mxu0 0
    %257 = vmatpush1.bf16.msra.mxu0 0
    %258 = vmatprep.subr.bf16.mxu0 0
    %259 = vmatpush1.bf16.msra.mxu0 0
    %260 = vmatprep.subr.bf16.mxu0 0
    %261 = vmatpush1.bf16.msra.mxu0 0
    %262 = vmatprep.mubr.bf16.mxu0 0
    %263 = vmatmul.mubr.bf16.gmra.mrb[0].mxu0 %v160
    %v264 = vpop.f32.mrb[0].mxu0
    %v265 = vadd.f32 %v181, %v264
    %v266 = vpop.f32.mrb[0].mxu0
    %v267 = vpop.f32.mrb[0].mxu0
    %v268 = vpop.f32.mrb[0].mxu0
    %269 = vdwg.mxu0
    %v270 = vmax.f32 %v265, 0.0
    %v271 = vpack.c.bf16 %v270, %v270
    %v272 = vld [vmem:[#allocation8] sm:$0xf]
    %v273 = vld [vmem:[#allocation8 + $0x4] sm:$0xf]
    %v274 = vld [vmem:[#allocation8 + $0x8] sm:$0xf]
    %v275 = vld [vmem:[#allocation8 + $0xc] sm:$0xf]
    %v276 = vld [vmem:[#allocation8 + $0x10] sm:$0xf]
    %v277 = vld [vmem:[#allocation8 + $0x14] sm:$0xf]
    %v278 = vld [vmem:[#allocation8 + $0x18] sm:$0xf]
    %v279 = vld [vmem:[#allocation8 + $0x1c] sm:$0xf]
    %v280 = vld [vmem:[#allocation8 + $0x20] sm:$0xf]
    %v281 = vld [vmem:[#allocation8 + $0x24] sm:$0xf]
    %v282 = vld [vmem:[#allocation8 + $0x28] sm:$0xf]
    %v283 = vld [vmem:[#allocation8 + $0x2c] sm:$0xf]
    %v284 = vld [vmem:[#allocation8 + $0x30] sm:$0xf]
    %v285 = vld [vmem:[#allocation8 + $0x34] sm:$0xf]
    %v286 = vld [vmem:[#allocation8 + $0x38] sm:$0xf]
    %v287 = vld [vmem:[#allocation8 + $0x3c] sm:$0xf]
    %v288 = vld [vmem:[%s5 + $0x2] sm:$0x1]
    %v289 = vlaneseq
    %v290 = vshrl.u32 %v289, 7
    %v291 = vsub.s32 0, %v290
    %v292 = vrot.slane %v288, %v291
    %v309 = vunpack.c.l.b16 %v272
    %v310 = vunpack.c.l.b16 %v273
    %v311 = vunpack.c.l.b16 %v274
    %v312 = vunpack.c.l.b16 %v275
    %v313 = vunpack.c.l.b16 %v276
    %v314 = vunpack.c.l.b16 %v277
    %v315 = vunpack.c.l.b16 %v278
    %v316 = vunpack.c.l.b16 %v279
    %v317 = vunpack.c.l.b16 %v280
    %v318 = vunpack.c.l.b16 %v281
    %v319 = vunpack.c.l.b16 %v282
    %v320 = vunpack.c.l.b16 %v283
    %v321 = vunpack.c.l.b16 %v284
    %v322 = vunpack.c.l.b16 %v285
    %v323 = vunpack.c.l.b16 %v286
    %v324 = vunpack.c.l.b16 %v287
    %v325 = vpack.c.b16 %v310, %v309
    %v326 = vpack.c.b16 %v312, %v311
    %v327 = vpack.c.b16 %v314, %v313
    %v328 = vpack.c.b16 %v316, %v315
    %v329 = vpack.c.b16 %v318, %v317
    %v330 = vpack.c.b16 %v320, %v319
    %v331 = vpack.c.b16 %v322, %v321
    %v332 = vpack.c.b16 %v324, %v323
    %341 = vmatprep.subr.bf16.mxu0 0
    %342 = vmatpush1.bf16.msra.mxu0 %v325
    %343 = vmatprep.subr.bf16.mxu0 0
    %344 = vmatpush1.bf16.msra.mxu0 %v326
    %345 = vmatprep.subr.bf16.mxu0 0
    %346 = vmatpush1.bf16.msra.mxu0 %v327
    %347 = vmatprep.subr.bf16.mxu0 0
    %348 = vmatpush1.bf16.msra.mxu0 %v328
    %349 = vmatprep.subr.bf16.mxu0 0
    %350 = vmatpush1.bf16.msra.mxu0 %v329
    %351 = vmatprep.subr.bf16.mxu0 0
    %352 = vmatpush1.bf16.msra.mxu0 %v330
    %353 = vmatprep.subr.bf16.mxu0 0
    %354 = vmatpush1.bf16.msra.mxu0 %v331
    %355 = vmatprep.subr.bf16.mxu0 0
    %356 = vmatpush1.bf16.msra.mxu0 %v332
    %357 = vmatprep.subr.bf16.mxu0 0
    %358 = vmatpush1.bf16.msra.mxu0 0
    %359 = vmatprep.subr.bf16.mxu0 0
    %360 = vmatpush1.bf16.msra.mxu0 0
    %361 = vmatprep.subr.bf16.mxu0 0
    %362 = vmatpush1.bf16.msra.mxu0 0
    %363 = vmatprep.subr.bf16.mxu0 0
    %364 = vmatpush1.bf16.msra.mxu0 0
    %365 = vmatprep.subr.bf16.mxu0 0
    %366 = vmatpush1.bf16.msra.mxu0 0
    %367 = vmatprep.subr.bf16.mxu0 0
    %368 = vmatpush1.bf16.msra.mxu0 0
    %369 = vmatprep.subr.bf16.mxu0 0
    %370 = vmatpush1.bf16.msra.mxu0 0
    %371 = vmatprep.subr.bf16.mxu0 0
    %372 = vmatpush1.bf16.msra.mxu0 0
    %373 = vmatprep.mubr.bf16.mxu0 0
    %374 = vmatmul.mubr.bf16.gmra.mrb[0].mxu0 %v271
    %v375 = vpop.f32.mrb[0].mxu0
    %v376 = vadd.f32 %v292, %v375
    %v377 = vpop.f32.mrb[0].mxu0
    %v378 = vpop.f32.mrb[0].mxu0
    %v379 = vpop.f32.mrb[0].mxu0
    %380 = vdwg.mxu0
    %v381 = vmax.f32 %v376, 0.0
    %v382 = vpack.c.bf16 %v381, %v381
    %v383 = vld [vmem:[#allocation10] sm:$0xf]
    %v384 = vld [vmem:[#allocation10 + $0x4] sm:$0xf]
    %v385 = vld [vmem:[#allocation10 + $0x8] sm:$0xf]
    %v386 = vld [vmem:[#allocation10 + $0xc] sm:$0xf]
    %v387 = vld [vmem:[#allocation10 + $0x10] sm:$0xf]
    %v388 = vld [vmem:[#allocation10 + $0x14] sm:$0xf]
    %v389 = vld [vmem:[#allocation10 + $0x18] sm:$0xf]
    %v390 = vld [vmem:[#allocation10 + $0x1c] sm:$0xf]
    %v391 = vld [vmem:[#allocation10 + $0x20] sm:$0xf]
    %v392 = vld [vmem:[#allocation10 + $0x24] sm:$0xf]
    %v393 = vld [vmem:[#allocation10 + $0x28] sm:$0xf]
    %v394 = vld [vmem:[#allocation10 + $0x2c] sm:$0xf]
    %v395 = vld [vmem:[#allocation10 + $0x30] sm:$0xf]
    %v396 = vld [vmem:[#allocation10 + $0x34] sm:$0xf]
    %v397 = vld [vmem:[#allocation10 + $0x38] sm:$0xf]
    %v398 = vld [vmem:[#allocation10 + $0x3c] sm:$0xf]
    %v399 = vld [vmem:[%s6] sm:$0x1]
    %v401 = vlaneseq
    %v402 = vshrl.u32 %v401, 7
    %v403 = vsub.s32 0, %v402
    %v404 = vrot.slane %v399, %v403
    %v422 = vunpack.c.l.b16 %v383
    %v423 = vunpack.c.l.b16 %v384
    %v424 = vunpack.c.l.b16 %v385
    %v425 = vunpack.c.l.b16 %v386
    %v426 = vunpack.c.l.b16 %v387
    %v427 = vunpack.c.l.b16 %v388
    %v428 = vunpack.c.l.b16 %v389
    %v429 = vunpack.c.l.b16 %v390
    %v430 = vunpack.c.l.b16 %v391
    %v431 = vunpack.c.l.b16 %v392
    %v432 = vunpack.c.l.b16 %v393
    %v433 = vunpack.c.l.b16 %v394
    %v434 = vunpack.c.l.b16 %v395
    %v435 = vunpack.c.l.b16 %v396
    %v436 = vunpack.c.l.b16 %v397
    %v437 = vunpack.c.l.b16 %v398
    %v438 = vpack.c.b16 %v423, %v422
    %v439 = vpack.c.b16 %v425, %v424
    %v440 = vpack.c.b16 %v427, %v426
    %v441 = vpack.c.b16 %v429, %v428
    %v442 = vpack.c.b16 %v431, %v430
    %v443 = vpack.c.b16 %v433, %v432
    %v444 = vpack.c.b16 %v435, %v434
    %v445 = vpack.c.b16 %v437, %v436
    %454 = vmatprep.subr.bf16.mxu0 0
    %455 = vmatpush1.bf16.msra.mxu0 %v438
    %456 = vmatprep.subr.bf16.mxu0 0
    %457 = vmatpush1.bf16.msra.mxu0 %v439
    %458 = vmatprep.subr.bf16.mxu0 0
    %459 = vmatpush1.bf16.msra.mxu0 %v440
    %460 = vmatprep.subr.bf16.mxu0 0
    %461 = vmatpush1.bf16.msra.mxu0 %v441
    %462 = vmatprep.subr.bf16.mxu0 0
    %463 = vmatpush1.bf16.msra.mxu0 %v442
    %464 = vmatprep.subr.bf16.mxu0 0
    %465 = vmatpush1.bf16.msra.mxu0 %v443
    %466 = vmatprep.subr.bf16.mxu0 0
    %467 = vmatpush1.bf16.msra.mxu0 %v444
    %468 = vmatprep.subr.bf16.mxu0 0
    %469 = vmatpush1.bf16.msra.mxu0 %v445
    %470 = vmatprep.subr.bf16.mxu0 0
    %471 = vmatpush1.bf16.msra.mxu0 0
    %472 = vmatprep.subr.bf16.mxu0 0
    %473 = vmatpush1.bf16.msra.mxu0 0
    %474 = vmatprep.subr.bf16.mxu0 0
    %475 = vmatpush1.bf16.msra.mxu0 0
    %476 = vmatprep.subr.bf16.mxu0 0
    %477 = vmatpush1.bf16.msra.mxu0 0
    %478 = vmatprep.subr.bf16.mxu0 0
    %479 = vmatpush1.bf16.msra.mxu0 0
    %480 = vmatprep.subr.bf16.mxu0 0
    %481 = vmatpush1.bf16.msra.mxu0 0
    %482 = vmatprep.subr.bf16.mxu0 0
    %483 = vmatpush1.bf16.msra.mxu0 0
    %484 = vmatprep.subr.bf16.mxu0 0
    %485 = vmatpush1.bf16.msra.mxu0 0
    %486 = vmatprep.mubr.bf16.mxu0 0
    %487 = vmatmul.mubr.bf16.gmra.mrb[0].mxu0 %v382
    %v488 = vpop.f32.mrb[0].mxu0
    %v489 = vadd.f32 %v404, %v488
    %v490 = vpop.f32.mrb[0].mxu0
    %v491 = vpop.f32.mrb[0].mxu0
    %v492 = vpop.f32.mrb[0].mxu0
    %493 = vdwg.mxu0
    %v494 = vtanh.pop %v489
    %v495 = vmul.f32 %v494, 2.0
    %496 = vst [vmem:[#allocation11] sm:$0xff] %v495
    // Predicated region
    $region50: #{tpu_custom_call.1} parent=1 // pred_check
      _
    $region51: #{tpu_custom_call.1} parent=1 // pred_check_branch
      %498 = sbr.rel (0) target = $region53
    $region52: #{tpu_custom_call.1} parent=1 // pred_region
      %s500 = ssub.s32 128, 128
      %501 = vsyncadd [#allocation4], %s500
      %s503 = sshll.u32 [#allocation11], 4
      %s504 = int_to_ptr.vmem [resolvable:$true] %s503
      %506 = dma.vmem_to_hbm [thread:$0]  %s504, 128, %s7, [#allocation4]
    $region53: #{tpu_custom_call.1} parent=1 // pred_fallthru
      _
    // Predicated region
    $region54: #{tpu_custom_call.1} parent=1 // pred_check
      _
    $region55: #{tpu_custom_call.1} parent=1 // pred_check_branch
      %508 = sbr.rel (0) target = $region57
    $region56: #{tpu_custom_call.1} parent=1 // pred_region
      %509 = dma.done [#allocation4], 128
    $region57: #{tpu_custom_call.1} parent=1 // pred_fallthru
      _
    %510 = vsyncpa [#allocation3], 1
    %511 = vsyncpa [#allocation6], 1
    %512 = vsyncpa [#allocation9], 1
    %513 = vsyncpa [#allocation4], 1

</llo_original>
